<compile_context>
chip_gen: v7x
topology: tpu7x:2x2x1
jax: 0.10.0
libtpu: 0.0.40
codegen_flags: <defaults>
</compile_context>

<pallas_src>
import functools
import math

import jax
import jax.numpy as jnp
from jax.experimental import pallas as pl
from jax.experimental.pallas import tpu as pltpu


_INV_TANH_10 = 1.0 / math.tanh(10.0)     # hoisted: multiply instead of divide
_BIG_VSQ = 1e30                          # sentinel ||v||^2 for padded vocab cols

_VMEM_BUDGET = 40 * 1024 * 1024          # working-set target (safe on v5e/v6e/v7x)
_VMEM_LIMIT = 48 * 1024 * 1024           # scoped-VMEM limit we request


def _composition_kernel(x_ref, vt_ref, vsq_ref, out_ref, *, inv_dim):
    # x_ref:   (TM, Dp) tile of flattened patches (zero-padded along D)
    # vt_ref:  (Dp, Vp) pre-transposed vocabulary, pre-scaled by 2/D (resident)
    # vsq_ref: (1,  Vp) precomputed ||v||^2 / D (padded cols = _BIG_VSQ)
    # out_ref: (TM, Vp) composition matrix tile (lane-dense)
    x = x_ref[...]

    # (2/D) * x.v on the MXU; ||x||^2/D on the VPU/XLU.
    dot2 = jnp.dot(x, vt_ref[...], preferred_element_type=jnp.float32)   # (TM, Vp)
    x_sq = jnp.sum(x * x, axis=-1, keepdims=True) * jnp.float32(inv_dim)  # (TM, 1)

    # mean((x - v)^2); clamp tiny negative values from cancellation.
    mse = jnp.maximum(x_sq - dot2 + vsq_ref[...], 0.0)

    # tanh-normalize (EUP), clip, sharpen (VPU).  mse >= 0 so the lower clip of
    # the original module is a no-op; padded vocab columns have a huge mse ->
    # mse_norm == 1 -> comp == 0, so they never perturb the row sum below.
    mse_norm = jnp.minimum(jnp.tanh(mse) * jnp.float32(_INV_TANH_10), 1.0)
    t = 1.0 - mse_norm
    t2 = t * t
    comp = t2 * t2 * t                                                    # (1-m)^5

    # Row-normalize with an EUP reciprocal + one Newton refinement (full f32
    # accuracy, no VALU divide).  A row whose comp entries are all zero (only
    # padded M rows / degenerate inputs — same 0/0 as the original module)
    # is sliced off by the wrapper.
    row_sum = jnp.sum(comp, axis=-1, keepdims=True)
    inv = pl.reciprocal(row_sum, approx=True)
    inv = inv * (2.0 - row_sum * inv)
    out_ref[...] = (comp * inv).astype(out_ref.dtype)


def _pick_tile_m(M, Dp, Vp):
    """Largest row tile (multiple of 8, <= 512) whose working set fits VMEM."""
    resident = 4 * (Dp * Vp + Vp)                 # vocab^T + ||v||^2 (single-buffered)
    per_row = 4 * (2 * Dp + 3 * Vp)               # double-buffered x/out tiles + slack
    avail = _VMEM_BUDGET - resident
    if avail <= per_row * 8:
        # TODO(synk): tile over the vocabulary axis for extremely large V*D.
        return 8
    tm = min(512, (avail // per_row) // 8 * 8, ((M + 7) // 8) * 8)
    return max(8, int(tm))


def compositional_layer_forward(x, vocabulary, *, tile_m=None):
    """x: (B, N, C, H, W) float32; vocabulary: (V, C, H, W) float32.

    Returns composition_matrix: (B, N, V) float32.
    """
    B, N, C, H, W = x.shape
    V = vocabulary.shape[0]
    D = C * H * W
    M = B * N

    # Pad D and V to lane width (128) for aligned loads / lane-dense stores.
    Dp = ((D + 127) // 128) * 128
    Vp = ((V + 127) // 128) * 128

    tm = tile_m if tile_m is not None else _pick_tile_m(M, Dp, Vp)
    tm = max(8, min(tm, ((M + 7) // 8) * 8))
    Mp = ((M + tm - 1) // tm) * tm

    x_flat = x.reshape(M, D).astype(jnp.float32)
    x_flat = jnp.pad(x_flat, ((0, Mp - M), (0, Dp - D)))

    vocab_flat = vocabulary.reshape(V, D).astype(jnp.float32)
    # Hoisted loop-invariants: scaled squared norms and the scaled transpose.
    v_sq = jnp.sum(vocab_flat * vocab_flat, axis=-1) * (1.0 / D)            # (V,)
    v_sq = jnp.pad(v_sq, (0, Vp - V), constant_values=_BIG_VSQ)[None, :]    # (1, Vp)
    vocab_t = jnp.pad(vocab_flat * (2.0 / D), ((0, Vp - V), (0, Dp - D))).T  # (Dp, Vp)

    kernel = functools.partial(_composition_kernel, inv_dim=1.0 / D)

    cost = pl.CostEstimate(
        flops=2 * Mp * Dp * Vp + 12 * Mp * Vp,
        transcendentals=Mp * Vp + Mp,            # tanh per element + rcp per row
        bytes_accessed=4 * (Mp * Dp + Dp * Vp + Vp + Mp * Vp),
    )

    out = pl.pallas_call(
        kernel,
        out_shape=jax.ShapeDtypeStruct((Mp, Vp), jnp.float32),
        grid_spec=pltpu.PrefetchScalarGridSpec(
            num_scalar_prefetch=0,
            grid=(Mp // tm,),
            in_specs=[
                pl.BlockSpec((tm, Dp), lambda i: (i, 0)),   # x tile (streams)
                pl.BlockSpec((Dp, Vp), lambda i: (0, 0)),   # vocab^T (resident)
                pl.BlockSpec((1, Vp), lambda i: (0, 0)),    # ||v||^2/D (resident)
            ],
            out_specs=pl.BlockSpec((tm, Vp), lambda i: (i, 0)),
        ),
        compiler_params=pltpu.CompilerParams(
            dimension_semantics=("parallel",),
            vmem_limit_bytes=_VMEM_LIMIT,
        ),
        cost_estimate=cost,
    )(x_flat, vocab_t, v_sq)

    return out[:M, :V].reshape(B, N, V)


def init_vocabulary(key, vocab_size, in_channels, patch_size):
    """Deterministic init mirroring CompositionalLayer.__init__."""
    vocab = jax.random.normal(
        key, (vocab_size, in_channels, patch_size, patch_size), jnp.float32)
    if in_channels != 1:
        vocab = jnp.abs(vocab)
        vocab = vocab / jnp.sum(vocab, axis=1, keepdims=True)
    return vocab


def _reference_forward(x, vocabulary):
    # Pure-JAX reference matching the PyTorch module exactly.
    xe = x[:, :, None]                       # (B, N, 1, C, H, W)
    ve = vocabulary[None, None]              # (1, 1, V, C, H, W)
    mse = jnp.mean((xe - ve) ** 2, axis=(-1, -2, -3))
    mse_n = jnp.clip(jnp.tanh(mse) / jnp.tanh(10.0), 0.0, 1.0)
    comp = (1.0 - mse_n) ** 5
    return comp / jnp.sum(comp, axis=-1, keepdims=True)


if __name__ == "__main__":
    key = jax.random.PRNGKey(0)
    k_vocab, k_x = jax.random.split(key)

    # Small shapes consistent with the module's forward contract.
    B, N, C, P = 2, 8, 4, 3
    vocab_size = 16

    vocabulary = init_vocabulary(k_vocab, vocab_size, C, P)
    x = jax.random.normal(k_x, (B, N, C, P, P), jnp.float32)

    out = compositional_layer_forward(x, vocabulary)
    out = jax.block_until_ready(out)

    ref = _reference_forward(x, vocabulary)
    assert out.shape == (B, N, vocab_size), out.shape
    max_err = float(jnp.max(jnp.abs(out - ref)))
    assert jnp.allclose(out, ref, atol=1e-4, rtol=1e-4), max_err

    print("KERNEL_OK")
</pallas_src>

<mosaic_0001>
module attributes {stable_mosaic.version = 11 : i64} {
  func.func @_composition_kernel(%arg0: i32, %arg1: memref<16x128xf32, #tpu.memory_space<vmem>>, %arg2: memref<128x128xf32, #tpu.memory_space<vmem>>, %arg3: memref<1x128xf32, #tpu.memory_space<vmem>>, %arg4: memref<16x128xf32, #tpu.memory_space<vmem>>) attributes {dimension_semantics = [#tpu.dimension_semantics<parallel>], iteration_bounds = array<i64: 1>, scalar_prefetch = 0 : i64, scratch_operands = 0 : i64, tpu.core_type = #tpu.core_type<tc>, window_params = [{transform_indices = @transform_0, window_bounds = array<i64: 16, 128>}, {pipeline_mode = #tpu.pipeline_mode<synchronous>, transform_indices = @transform_1, window_bounds = array<i64: 128, 128>}, {pipeline_mode = #tpu.pipeline_mode<synchronous>, transform_indices = @transform_2, window_bounds = array<i64: 1, 128>}, {transform_indices = @transform_3, window_bounds = array<i64: 16, 128>}]} {
    %c0 = arith.constant 0 : index
    %c0_0 = arith.constant 0 : index
    %0 = vector.load %arg1[%c0, %c0_0] : memref<16x128xf32, #tpu.memory_space<vmem>>, vector<16x128xf32>
    %c0_1 = arith.constant 0 : index
    %c0_2 = arith.constant 0 : index
    %1 = vector.load %arg2[%c0_1, %c0_2] : memref<128x128xf32, #tpu.memory_space<vmem>>, vector<128x128xf32>
    %cst = arith.constant dense<0.000000e+00> : vector<16x128xf32>
    %2 = tpu.matmul %0, %1, %cst {dimension_numbers = #tpu.dot_dimension_numbers<[1], [0], [0], [1], [0, 0, 1, 1], [], []>} : vector<16x128xf32>, vector<128x128xf32>, vector<16x128xf32> -> vector<16x128xf32>
    %3 = arith.mulf %0, %0 : vector<16x128xf32>
    %cst_3 = arith.constant dense<0.000000e+00> : vector<16xf32>
    %4 = vector.multi_reduction <add>, %3, %cst_3 [1] : vector<16x128xf32> to vector<16xf32>
    %5 = vector.shape_cast %4 : vector<16xf32> to vector<16x1xf32>
    %cst_4 = arith.constant 0.027777778 : f32
    %6 = vector.broadcast %cst_4 : f32 to vector<16x1xf32>
    %7 = arith.mulf %5, %6 : vector<16x1xf32>
    %8 = vector.broadcast %7 : vector<16x1xf32> to vector<16x128xf32>
    %9 = arith.subf %8, %2 : vector<16x128xf32>
    %c0_5 = arith.constant 0 : index
    %c0_6 = arith.constant 0 : index
    %10 = vector.load %arg3[%c0_5, %c0_6] : memref<1x128xf32, #tpu.memory_space<vmem>>, vector<1x128xf32>
    %11 = vector.broadcast %10 : vector<1x128xf32> to vector<16x128xf32>
    %12 = arith.addf %9, %11 : vector<16x128xf32>
    %cst_7 = arith.constant 0.000000e+00 : f32
    %13 = vector.broadcast %cst_7 : f32 to vector<16x128xf32>
    %14 = arith.maximumf %12, %13 : vector<16x128xf32>
    %15 = math.tanh %14 : vector<16x128xf32>
    %cst_8 = arith.constant 1.000000e+00 : f32
    %16 = vector.broadcast %cst_8 : f32 to vector<16x128xf32>
    %17 = arith.mulf %15, %16 : vector<16x128xf32>
    %cst_9 = arith.constant 1.000000e+00 : f32
    %18 = vector.broadcast %cst_9 : f32 to vector<16x128xf32>
    %19 = arith.minimumf %17, %18 : vector<16x128xf32>
    %cst_10 = arith.constant 1.000000e+00 : f32
    %20 = vector.broadcast %cst_10 : f32 to vector<16x128xf32>
    %21 = arith.subf %20, %19 : vector<16x128xf32>
    %22 = arith.mulf %21, %21 : vector<16x128xf32>
    %23 = arith.mulf %22, %22 : vector<16x128xf32>
    %24 = arith.mulf %23, %21 : vector<16x128xf32>
    %cst_11 = arith.constant dense<0.000000e+00> : vector<16xf32>
    %25 = vector.multi_reduction <add>, %24, %cst_11 [1] : vector<16x128xf32> to vector<16xf32>
    %26 = vector.shape_cast %25 : vector<16xf32> to vector<16x1xf32>
    %27 = tpu.reciprocal %26 {approx = true} : vector<16x1xf32> -> vector<16x1xf32>
    %28 = arith.mulf %26, %27 : vector<16x1xf32>
    %cst_12 = arith.constant 2.000000e+00 : f32
    %29 = vector.broadcast %cst_12 : f32 to vector<16x1xf32>
    %30 = arith.subf %29, %28 : vector<16x1xf32>
    %31 = arith.mulf %27, %30 : vector<16x1xf32>
    %32 = vector.broadcast %31 : vector<16x1xf32> to vector<16x128xf32>
    %33 = arith.mulf %24, %32 : vector<16x128xf32>
    %c0_13 = arith.constant 0 : index
    %c0_14 = arith.constant 0 : index
    %34 = vector.load %arg4[%c0_13, %c0_14] : memref<16x128xf32, #tpu.memory_space<vmem>>, vector<16x128xf32>
    tpu.vector_store %arg4[%c0_13, %c0_14], %33 {strides = array<i32>} : memref<16x128xf32, #tpu.memory_space<vmem>>, vector<16x128xf32>,
    return
  }
  func.func @transform_0(%arg0: i32) -> (i32, i32) {
    %c0_i32 = arith.constant 0 : i32
    %c0_i32_0 = arith.constant 0 : i32
    return %arg0, %c0_i32 : i32, i32
  }
  func.func @transform_1(%arg0: i32) -> (i32, i32) {
    %c0_i32 = arith.constant 0 : i32
    %c0_i32_0 = arith.constant 0 : i32
    %c0_i32_1 = arith.constant 0 : i32
    return %c0_i32, %c0_i32_0 : i32, i32
  }
  func.func @transform_2(%arg0: i32) -> (i32, i32) {
    %c0_i32 = arith.constant 0 : i32
    %c0_i32_0 = arith.constant 0 : i32
    %c0_i32_1 = arith.constant 0 : i32
    return %c0_i32, %c0_i32_0 : i32, i32
  }
  func.func @transform_3(%arg0: i32) -> (i32, i32) {
    %c0_i32 = arith.constant 0 : i32
    %c0_i32_0 = arith.constant 0 : i32
    return %arg0, %c0_i32 : i32, i32
  }
}

</mosaic_0001>

<llo_original>
// kernel: tpu_custom_call.1
$region0: #{tpu_custom_call.1}
  #allocation0 [shape = 'u32[]', space=smem, size = 0x4, offset = 0x4, fixed_abs, tag = 'smem constant byte address 0x4 - core index']
  #allocation1 [shape = 'u32[144,128]{1,0:T(1,128)}', space=vmem, size = 0x12000, scoped, tag = 'internal scratch']
  %s0 = inlined_call_operand.hbm [shape: f32[16,128], index: 0, kind: input, shape index: {}]
  %s1 = inlined_call_operand.hbm [shape: f32[128,128], index: 1, kind: input, shape index: {}]
  %s2 = inlined_call_operand.vmem [shape: f32[1,128], index: 2, kind: input, shape index: {}]
  %s3 = inlined_call_operand.hbm [shape: f32[16,128], index: 3, kind: output, shape index: {}]
  %s4 = sld [smem:[#allocation0]]
  $region30: #{tpu_custom_call.1} parent=0
    _
  %s6 = ssub.s32 1, %s4
  %s7 = scalar_select 0, %s6, %s4
  $region1: #{tpu_custom_call.1} parent=0
    #allocation2 [shape = 'u8[8192]{0}', space=vmem, size = 0x2000, scoped, tag = 'input window, operand 0, single buffered']
    #allocation3 [shape = 's32[1]{0}', space=sflag, size = 0x4, scoped, tag = 'scoped memory for tpu_custom_call.1']
    #allocation4 [shape = 's32[1]{0}', space=sflag, size = 0x4, scoped, tag = 'scoped memory for tpu_custom_call.1']
    #allocation5 [shape = 'u8[65536]{0}', space=vmem, size = 0x10000, scoped, tag = 'input window, operand 1, single buffered']
    #allocation6 [shape = 's32[1]{0}', space=sflag, size = 0x4, scoped, tag = 'scoped memory for tpu_custom_call.1']
    #allocation7 [shape = 'u8[8192]{0}', space=vmem, size = 0x2000, scoped, tag = 'output window, operand 0, single buffered']
    %8 = vsyncpa [#allocation3], 0
    %9 = vsyncpa [#allocation6], 0
    %10 = vsyncpa [#allocation4], 0
    // Predicated region
    $region2: #{tpu_custom_call.1} parent=1 // pred_check
      _
    $region3: #{tpu_custom_call.1} parent=1 // pred_check_branch
      %12 = sbr.rel (0) target = $region5
    $region4: #{tpu_custom_call.1} parent=1 // pred_region
      %s14 = ssub.s32 256, 256
      %15 = vsyncadd [#allocation3], %s14
      %s16 = sshll.u32 [#allocation2], 4
      %s17 = int_to_ptr.vmem [resolvable:$true] %s16
      %22 = dma.hbm_to_vmem [thread:$0]  %s0, 256, %s17, [#allocation3], 128, 128, 8
    $region5: #{tpu_custom_call.1} parent=1 // pred_fallthru
      _
    // Predicated region
    $region6: #{tpu_custom_call.1} parent=1 // pred_check
      _
    $region7: #{tpu_custom_call.1} parent=1 // pred_check_branch
      %24 = sbr.rel (0) target = $region9
    $region8: #{tpu_custom_call.1} parent=1 // pred_region
      %s26 = ssub.s32 2048, 2048
      %27 = vsyncadd [#allocation6], %s26
      %s28 = sshll.u32 [#allocation5], 4
      %s29 = int_to_ptr.vmem [resolvable:$true] %s28
      %34 = dma.hbm_to_vmem [thread:$0]  %s1, 2048, %s29, [#allocation6], 128, 128, 8
    $region9: #{tpu_custom_call.1} parent=1 // pred_fallthru
      _
    // Predicated region
    $region10: #{tpu_custom_call.1} parent=1 // pred_check
      _
    $region11: #{tpu_custom_call.1} parent=1 // pred_check_branch
      %36 = sbr.rel (0) target = $region13
    $region12: #{tpu_custom_call.1} parent=1 // pred_region
      _
    $region13: #{tpu_custom_call.1} parent=1 // pred_fallthru
      _
    // Predicated region
    $region14: #{tpu_custom_call.1} parent=1 // pred_check
      _
    $region15: #{tpu_custom_call.1} parent=1 // pred_check_branch
      %38 = sbr.rel (0) target = $region17
    $region16: #{tpu_custom_call.1} parent=1 // pred_region
      %39 = dma.done [#allocation3], 256
    $region17: #{tpu_custom_call.1} parent=1 // pred_fallthru
      _
    // Predicated region
    $region18: #{tpu_custom_call.1} parent=1 // pred_check
      _
    $region19: #{tpu_custom_call.1} parent=1 // pred_check_branch
      %41 = sbr.rel (0) target = $region21
    $region20: #{tpu_custom_call.1} parent=1 // pred_region
      %42 = dma.done [#allocation6], 2048
    $region21: #{tpu_custom_call.1} parent=1 // pred_fallthru
      _
    %v43 = vld [vmem:[#allocation2] sm:$0xff]
    %v44 = vld [vmem:[#allocation2 + $0x8] sm:$0xff]
    %v45 = vld [vmem:[#allocation5] sm:$0xff]
    %v46 = vld [vmem:[#allocation5 + $0x8] sm:$0xff]
    %v47 = vld [vmem:[#allocation5 + $0x10] sm:$0xff]
    %v48 = vld [vmem:[#allocation5 + $0x18] sm:$0xff]
    %v49 = vld [vmem:[#allocation5 + $0x20] sm:$0xff]
    %v50 = vld [vmem:[#allocation5 + $0x28] sm:$0xff]
    %v51 = vld [vmem:[#allocation5 + $0x30] sm:$0xff]
    %v52 = vld [vmem:[#allocation5 + $0x38] sm:$0xff]
    %v53 = vld [vmem:[#allocation5 + $0x40] sm:$0xff]
    %v54 = vld [vmem:[#allocation5 + $0x48] sm:$0xff]
    %v55 = vld [vmem:[#allocation5 + $0x50] sm:$0xff]
    %v56 = vld [vmem:[#allocation5 + $0x58] sm:$0xff]
    %v57 = vld [vmem:[#allocation5 + $0x60] sm:$0xff]
    %v58 = vld [vmem:[#allocation5 + $0x68] sm:$0xff]
    %v59 = vld [vmem:[#allocation5 + $0x70] sm:$0xff]
    %v60 = vld [vmem:[#allocation5 + $0x78] sm:$0xff]
    %61 = vmatprep.subr.mxu0 0.0
    %62 = vmatpush1.msra.mxu0 %v45
    %63 = vmatprep.subr.mxu0 0.0
    %64 = vmatpush1.msra.mxu0 %v46
    %65 = vmatprep.subr.mxu0 0.0
    %66 = vmatpush1.msra.mxu0 %v47
    %67 = vmatprep.subr.mxu0 0.0
    %68 = vmatpush1.msra.mxu0 %v48
    %69 = vmatprep.subr.mxu0 0.0
    %70 = vmatpush1.msra.mxu0 %v49
    %71 = vmatprep.subr.mxu0 0.0
    %72 = vmatpush1.msra.mxu0 %v50
    %73 = vmatprep.subr.mxu0 0.0
    %74 = vmatpush1.msra.mxu0 %v51
    %75 = vmatprep.subr.mxu0 0.0
    %76 = vmatpush1.msra.mxu0 %v52
    %77 = vmatprep.subr.mxu0 0.0
    %78 = vmatpush1.msra.mxu0 %v53
    %79 = vmatprep.subr.mxu0 0.0
    %80 = vmatpush1.msra.mxu0 %v54
    %81 = vmatprep.subr.mxu0 0.0
    %82 = vmatpush1.msra.mxu0 %v55
    %83 = vmatprep.subr.mxu0 0.0
    %84 = vmatpush1.msra.mxu0 %v56
    %85 = vmatprep.subr.mxu0 0.0
    %86 = vmatpush1.msra.mxu0 %v57
    %87 = vmatprep.subr.mxu0 0.0
    %88 = vmatpush1.msra.mxu0 %v58
    %89 = vmatprep.subr.mxu0 0.0
    %90 = vmatpush1.msra.mxu0 %v59
    %91 = vmatprep.subr.mxu0 0.0
    %92 = vmatpush1.msra.mxu0 %v60
    %93 = vmatprep.subr.mxu0 0.0
    %94 = vmatpush1.msra.mxu0 0.0
    %95 = vmatprep.subr.mxu0 0.0
    %96 = vmatpush1.msra.mxu0 0.0
    %97 = vmatprep.subr.mxu0 0.0
    %98 = vmatpush1.msra.mxu0 0.0
    %99 = vmatprep.subr.mxu0 0.0
    %100 = vmatpush1.msra.mxu0 0.0
    %101 = vmatprep.subr.mxu0 0.0
    %102 = vmatpush1.msra.mxu0 0.0
    %103 = vmatprep.subr.mxu0 0.0
    %104 = vmatpush1.msra.mxu0 0.0
    %105 = vmatprep.subr.mxu0 0.0
    %106 = vmatpush1.msra.mxu0 0.0
    %107 = vmatprep.subr.mxu0 0.0
    %108 = vmatpush1.msra.mxu0 0.0
    %109 = vmatprep.subr.mxu0 0.0
    %110 = vmatpush1.msra.mxu0 0.0
    %111 = vmatprep.subr.mxu0 0.0
    %112 = vmatpush1.msra.mxu0 0.0
    %113 = vmatprep.subr.mxu0 0.0
    %114 = vmatpush1.msra.mxu0 0.0
    %115 = vmatprep.subr.mxu0 0.0
    %116 = vmatpush1.msra.mxu0 0.0
    %117 = vmatprep.subr.mxu0 0.0
    %118 = vmatpush1.msra.mxu0 0.0
    %119 = vmatprep.subr.mxu0 0.0
    %120 = vmatpush1.msra.mxu0 0.0
    %121 = vmatprep.subr.mxu0 0.0
    %122 = vmatpush1.msra.mxu0 0.0
    %123 = vmatprep.subr.mxu0 0.0
    %124 = vmatpush1.msra.mxu0 0.0
    %125 = vmatprep.mubr.f32.mxu0 0.0
    %126 = vmatmul.mubr.f32.gmra.mrb[0].mxu0 %v43
    %v127 = vpop.f32.mrb[0].mxu0
    %v128 = vadd.f32 0.0, %v127
    %v129 = vpop.f32.mrb[0].mxu0
    %130 = vmatprep.mubr.f32.mxu0 0.0
    %131 = vmatmul.mubr.f32.gmra.mrb[0].mxu0 %v44
    %v132 = vpop.f32.mrb[0].mxu0
    %v133 = vadd.f32 0.0, %v132
    %v134 = vpop.f32.mrb[0].mxu0
    %135 = vdwg.mxu0
    %v136 = vmul.f32 %v43, %v43
    %v137 = vmul.f32 %v44, %v44
    %138 = vadd.xlane.f32.xlu0 %v136
    %v139 = vpop.xlane.xlu0 %138
    %140 = vadd.xlane.f32.xlu0 %v137
    %v141 = vpop.xlane.xlu0 %140
    %v142 = vmul.f32 %v139, 0.027777778
    %v143 = vmul.f32 %v141, 0.027777778
    %v144 = vsub.f32 %v142, %v128
    %v145 = vsub.f32 %v143, %v133
    %v146 = vld [vmem:[%s2] sm:$0x1]
    %v148 = vlaneseq
    %v149 = vshrl.u32 %v148, 7
    %v150 = vsub.s32 0, %v149
    %v151 = vrot.slane %v146, %v150
    %v153 = vadd.f32 %v144, %v151
    %v154 = vadd.f32 %v145, %v151
    %v155 = vmax.f32 %v153, 0.0
    %v156 = vmax.f32 %v154, 0.0
    %v157 = vtanh.pop %v155
    %v158 = vtanh.pop %v156
    %v159 = vmin.f32 %v157, 1.0
    %v160 = vmin.f32 %v158, 1.0
    %v161 = vsub.f32 1.0, %v159
    %v162 = vsub.f32 1.0, %v160
    %v163 = vmul.f32 %v161, %v161
    %v164 = vmul.f32 %v162, %v162
    %v165 = vmul.f32 %v163, %v163
    %v166 = vmul.f32 %v164, %v164
    %v167 = vmul.f32 %v165, %v161
    %v168 = vmul.f32 %v166, %v162
    %169 = vadd.xlane.f32.xlu0 %v167
    %v170 = vpop.xlane.xlu0 %169
    %171 = vadd.xlane.f32.xlu0 %v168
    %v172 = vpop.xlane.xlu0 %171
    %v173 = vrcp.pop %v170
    %v174 = vrcp.pop %v172
    %v175 = vmul.f32 %v170, %v173
    %v176 = vmul.f32 %v172, %v174
    %v177 = vsub.f32 2.0, %v175
    %v178 = vsub.f32 2.0, %v176
    %v179 = vmul.f32 %v173, %v177
    %v180 = vmul.f32 %v174, %v178
    %v181 = vmul.f32 %v167, %v179
    %v182 = vmul.f32 %v168, %v180
    %183 = vst [vmem:[#allocation7] sm:$0xff] %v181
    %184 = vst [vmem:[#allocation7 + $0x8] sm:$0xff] %v182
    // Predicated region
    $region22: #{tpu_custom_call.1} parent=1 // pred_check
      _
    $region23: #{tpu_custom_call.1} parent=1 // pred_check_branch
      %186 = sbr.rel (0) target = $region25
    $region24: #{tpu_custom_call.1} parent=1 // pred_region
      %s188 = ssub.s32 256, 256
      %189 = vsyncadd [#allocation4], %s188
      %s190 = sshll.u32 [#allocation7], 4
      %s191 = int_to_ptr.vmem [resolvable:$true] %s190
      %196 = dma.vmem_to_hbm [thread:$0]  %s191, 256, %s3, [#allocation4], 128, 128, 8
    $region25: #{tpu_custom_call.1} parent=1 // pred_fallthru
      _
    // Predicated region
    $region26: #{tpu_custom_call.1} parent=1 // pred_check
      _
    $region27: #{tpu_custom_call.1} parent=1 // pred_check_branch
      %198 = sbr.rel (0) target = $region29
    $region28: #{tpu_custom_call.1} parent=1 // pred_region
      %199 = dma.done [#allocation4], 256
    $region29: #{tpu_custom_call.1} parent=1 // pred_fallthru
      _
    %200 = vsyncpa [#allocation3], 1
    %201 = vsyncpa [#allocation6], 1
    %202 = vsyncpa [#allocation4], 1

</llo_original>
